<compile_context>
chip_gen: v5e
topology: v5e:2x2
jax: 0.10.0
libtpu: 0.0.40
codegen_flags: <defaults>
</compile_context>

<pallas_src>
import functools
import math

import jax
import jax.numpy as jnp
from jax.experimental import pallas as pl
from jax.experimental.pallas import tpu as pltpu


def _round_up(x, m):
    return (x + m - 1) // m * m


def _vmem_budget_bytes():
    """Generation-aware (budget, vmem_limit) in bytes."""
    cap = 64 * 1024 * 1024  # conservative fallback: v7x per-TC VMEM
    try:
        info = pltpu.get_tpu_info()
        cap = int(getattr(info, "vmem_capacity_bytes", cap))
    except Exception:
        pass
    limit = min(cap * 3 // 4, 96 * 1024 * 1024)   # 48 MiB on v7x, 96 MiB on v5e/v6e
    limit = max(limit, 32 * 1024 * 1024)
    budget = int(limit * 0.8)                      # headroom for compiler scratch
    return budget, limit


# ----------------------------------------------------------------------------
# Kernels
# ----------------------------------------------------------------------------
def _normalize_epilogue(y, o_ref, K, dk_pad):
    # F.normalize(..., p=2, dim=1): L2 norm across the K factors per (node, l).
    # Static lane slices (VALU) instead of a 3-D reshape + cross-sublane reduce.
    slices = [y[:, k * dk_pad:(k + 1) * dk_pad] for k in range(K)]
    sq = slices[0] * slices[0]
    for k in range(1, K):
        sq = sq + slices[k] * slices[k]
    # 1 / max(||.||_2, 1e-12) == rsqrt(max(sq, 1e-24))    (EUP slot)
    inv = jax.lax.rsqrt(jnp.maximum(sq, 1e-24))
    # Direct per-factor stores (no jnp.concatenate second value chain).
    for k in range(K):
        o_ref[:, k * dk_pad:(k + 1) * dk_pad] = (slices[k] * inv).astype(o_ref.dtype)


def _init_disen_fused_kernel(x_ref, w_ref, b_ref, o_ref, *, K, dk_pad,
                             compute_dtype):
    # x_ref : (tile_n, d_in_pad)   VMEM f32
    # w_ref : (d_in_pad, kdk_pad)  VMEM, compute_dtype, RESIDENT across the grid
    # b_ref : (1, kdk_pad)         VMEM f32
    # o_ref : (tile_n, kdk_pad)    VMEM
    x = x_ref[...].astype(compute_dtype)
    y = jnp.dot(x, w_ref[...], preferred_element_type=jnp.float32)
    y = jnp.tanh(y + b_ref[...].astype(jnp.float32))
    _normalize_epilogue(y, o_ref, K, dk_pad)


def _init_disen_stream_kernel(x_ref, w_ref, b_ref, o_ref, acc_ref, *, K, dk_pad,
                              compute_dtype):
    # Streamed contraction (grid axis 1, "arbitrary", last).
    kc = pl.program_id(1)
    x = x_ref[...].astype(compute_dtype)
    partial = jnp.dot(x, w_ref[...], preferred_element_type=jnp.float32)

    @pl.when(kc == 0)
    def _():
        acc_ref[...] = partial          # first product initializes (no zero-fill)

    @pl.when(kc > 0)
    def _():
        acc_ref[...] += partial

    @pl.when(kc == pl.num_programs(1) - 1)
    def _():
        y = jnp.tanh(acc_ref[...] + b_ref[...].astype(jnp.float32))
        _normalize_epilogue(y, o_ref, K, dk_pad)


# ----------------------------------------------------------------------------
# Tile selection helpers
# ----------------------------------------------------------------------------
def _candidate_row_tiles(n_rows_pad):
    """MXU-friendly row tiles first (512/384/256/128), then multiples of 8."""
    cands = [c for c in (512, 384, 256, 128) if c <= n_rows_pad]
    c = min(120, n_rows_pad)
    c -= c % 8
    while c >= 8:
        if c not in cands:
            cands.append(c)
        c -= 8
    return cands or [8]


def _pick_row_tile(n_rows_pad, fits):
    cands = _candidate_row_tiles(n_rows_pad)
    fitting = [c for c in cands if fits(c)]
    if not fitting:
        return None
    best = fitting[0]
    # Prefer a tile that divides the row count (skips the padded-X HBM copy)
    # as long as it is not dramatically smaller than the best fitting tile.
    for c in fitting:
        if n_rows_pad % c == 0 and 2 * c >= best:
            return c
    return best


def _prep_weights(disen_weights, disen_bias, d_in_pad, dk_pad, compute_dtype):
    K, d_0, dk = disen_weights.shape
    # W[k, j, l] -> W2[j, k*dk_pad + l]  so (X @ W2)[i, k*dk_pad + l] = f_0[i,k,l]
    w_t = jnp.transpose(disen_weights, (1, 0, 2))                   # (d_0, K, dk)
    w_t = jnp.pad(w_t, ((0, d_in_pad - d_0), (0, 0), (0, dk_pad - dk)))
    w_flat = w_t.reshape(d_in_pad, K * dk_pad).astype(compute_dtype)
    b_flat = jnp.pad(disen_bias, ((0, 0), (0, 0), (0, dk_pad - dk)))
    b_flat = b_flat.reshape(1, K * dk_pad).astype(jnp.float32)
    return w_flat, b_flat


# ----------------------------------------------------------------------------
# InitDisenLayer forward via pallas_call
# ----------------------------------------------------------------------------
def init_disen_forward(X, disen_weights, disen_bias, *,
                       compute_dtype=jnp.bfloat16, out_dtype=jnp.float32):
    """InitDisenLayer.forward.

    Args:
      X:             (N, d_in) float32
      disen_weights: (K, d_0, d_in // K) float32   (requires d_0 == d_in)
      disen_bias:    (1, K, d_in // K) float32
      compute_dtype: dtype fed to the MXU (bf16 default; f32 for exactness);
                     accumulation and the epilogue are always f32.
      out_dtype:     dtype of the stored output (f32 default).
    Returns:
      f_0: (N, K, d_in // K) in out_dtype
    """
    N, d_in = X.shape
    K, d_0, dk = disen_weights.shape
    assert d_0 == d_in, "torch einsum 'ij,kjl->ikl' requires out_dim == in_dim"

    # Pad dk so K*dk_pad is a multiple of 128 (lane-dense, unmasked stores).
    m = 128 // math.gcd(K, 128)
    dk_pad = _round_up(dk, m)
    if dk > 64:
        dk_pad = _round_up(dk_pad, 128)   # lane-align big factor slabs
    # TODO(synk): for K not dividing 128 with small dk, avoid the per-factor
    # padding blow-up (pad only the total width + block-diagonal sum-of-squares).
    kdk_pad = K * dk_pad

    budget, vmem_limit = _vmem_budget_bytes()
    w_isz = jnp.dtype(compute_dtype).itemsize
    o_isz = jnp.dtype(out_dtype).itemsize
    n_rows_pad = _round_up(N, 8)

    # ---------- Path A: W resident in VMEM, single fused matmul per tile -----
    d_in_res = _round_up(d_in, 8)
    w_res_bytes = 2 * d_in_res * kdk_pad * w_isz + 2 * kdk_pad * 4   # W + bias

    def fits_resident(tn):
        return (w_res_bytes
                + 2 * tn * d_in_res * 4          # X tiles (f32, double-buffered)
                + 2 * tn * kdk_pad * o_isz       # output tiles
                ) <= budget

    tile_n = _pick_row_tile(n_rows_pad, fits_resident)

    if tile_n is not None:
        d_in_pad = d_in_res
        N_pad = _round_up(N, tile_n)
        Xp = X.astype(jnp.float32)
        if (N_pad, d_in_pad) != (N, d_in):
            Xp = jnp.pad(Xp, ((0, N_pad - N), (0, d_in_pad - d_in)))
        w_flat, b_flat = _prep_weights(disen_weights, disen_bias, d_in_pad,
                                       dk_pad, compute_dtype)
        nt = N_pad // tile_n
        kernel = functools.partial(_init_disen_fused_kernel, K=K, dk_pad=dk_pad,
                                   compute_dtype=compute_dtype)
        out_flat = pl.pallas_call(
            kernel,
            out_shape=jax.ShapeDtypeStruct((N_pad, kdk_pad), out_dtype),
            grid_spec=pltpu.PrefetchScalarGridSpec(
                num_scalar_prefetch=0,
                grid=(nt,),
                in_specs=[
                    pl.BlockSpec((tile_n, d_in_pad), lambda i: (i, 0)),    # X
                    pl.BlockSpec((d_in_pad, kdk_pad), lambda i: (0, 0)),   # W (resident)
                    pl.BlockSpec((1, kdk_pad), lambda i: (0, 0)),          # bias
                ],
                out_specs=pl.BlockSpec((tile_n, kdk_pad), lambda i: (i, 0)),
            ),
            compiler_params=pltpu.CompilerParams(
                dimension_semantics=("parallel",),
                vmem_limit_bytes=vmem_limit,
            ),
        )(Xp, w_flat, b_flat)
    else:
        # -------- Path B: stream W over a contraction grid axis (big d_in) ---
        def best_tk(tn):
            for tk in (1024, 512, 256, 128):
                usage = (2 * tn * tk * 4                 # X tiles
                         + 2 * tk * kdk_pad * w_isz      # W tiles
                         + 2 * kdk_pad * 4               # bias
                         + 2 * tn * kdk_pad * o_isz      # out tiles
                         + tn * kdk_pad * 4)             # f32 accumulator scratch
                if usage <= budget:
                    return tk
            return None

        tile_n = _pick_row_tile(n_rows_pad, lambda tn: best_tk(tn) is not None)
        if tile_n is None:
            # TODO(synk): add an output-column grid axis for huge d_in on v7x.
            tile_n = 8
        tile_k = best_tk(tile_n) or 128

        d_in_pad = _round_up(d_in, tile_k)
        nk = d_in_pad // tile_k
        N_pad = _round_up(N, tile_n)
        Xp = X.astype(jnp.float32)
        if (N_pad, d_in_pad) != (N, d_in):
            Xp = jnp.pad(Xp, ((0, N_pad - N), (0, d_in_pad - d_in)))
        w_flat, b_flat = _prep_weights(disen_weights, disen_bias, d_in_pad,
                                       dk_pad, compute_dtype)
        nt = N_pad // tile_n
        kernel = functools.partial(_init_disen_stream_kernel, K=K, dk_pad=dk_pad,
                                   compute_dtype=compute_dtype)
        out_flat = pl.pallas_call(
            kernel,
            out_shape=jax.ShapeDtypeStruct((N_pad, kdk_pad), out_dtype),
            grid_spec=pltpu.PrefetchScalarGridSpec(
                num_scalar_prefetch=0,
                grid=(nt, nk),                               # reduction axis last
                in_specs=[
                    pl.BlockSpec((tile_n, tile_k), lambda i, kc: (i, kc)),   # X
                    pl.BlockSpec((tile_k, kdk_pad), lambda i, kc: (kc, 0)),  # W
                    pl.BlockSpec((1, kdk_pad), lambda i, kc: (0, 0)),        # bias
                ],
                out_specs=pl.BlockSpec((tile_n, kdk_pad), lambda i, kc: (i, 0)),
                scratch_shapes=[pltpu.VMEM((tile_n, kdk_pad), jnp.float32)],
            ),
            compiler_params=pltpu.CompilerParams(
                dimension_semantics=("parallel", "arbitrary"),
                vmem_limit_bytes=vmem_limit,
            ),
        )(Xp, w_flat, b_flat)

    # strip row / lane padding, restore (N, K, dk) layout
    return out_flat[:N].reshape(N, K, dk_pad)[:, :, :dk]


# ----------------------------------------------------------------------------
# DINESEncoder forward
# ----------------------------------------------------------------------------
def dines_encoder_forward(X, params, edges_each_type=None, *,
                          compute_dtype=jnp.bfloat16, out_dtype=jnp.float32):
    """DINESEncoder.forward: f_0 = InitDisenLayer(X); DSGConv layers not given."""
    f_0 = init_disen_forward(X, params["disen_weights"], params["disen_bias"],
                             compute_dtype=compute_dtype, out_dtype=out_dtype)
    f_l = f_0
    # TODO(synk): apply params["conv_layers"] (DSGConv) once its definition exists.
    Z = f_l
    return Z


# ----------------------------------------------------------------------------
# Deterministic parameter construction (mirrors InitDisenLayer.setup_layers)
# ----------------------------------------------------------------------------
def make_params(key, in_dim, out_dim, num_factors):
    K, d_0, dk = num_factors, out_dim, in_dim // num_factors
    # xavier_uniform_ on a (K, d_0, dk) tensor:
    #   fan_in = d_0 * dk, fan_out = K * dk, limit = sqrt(6 / (fan_in + fan_out))
    fan_in, fan_out = d_0 * dk, K * dk
    limit = (6.0 / (fan_in + fan_out)) ** 0.5
    disen_weights = jax.random.uniform(
        key, (K, d_0, dk), dtype=jnp.float32, minval=-limit, maxval=limit
    )
    disen_bias = jnp.zeros((1, K, dk), dtype=jnp.float32)
    return {"disen_weights": disen_weights, "disen_bias": disen_bias}


if __name__ == "__main__":
    # Small shapes consistent with the module (einsum forces in_dim == out_dim).
    N, in_dim, out_dim, K = 16, 32, 32, 4

    key = jax.random.PRNGKey(0)
    kx, kw = jax.random.split(key)

    X = jax.random.normal(kx, (N, in_dim), dtype=jnp.float32)
    params = make_params(kw, in_dim, out_dim, K)

    # Pure-JAX reference of the same math.
    ref = jnp.einsum("ij,kjl->ikl", X, params["disen_weights"]) + params["disen_bias"]
    ref = jnp.tanh(ref)
    ref = ref / jnp.maximum(
        jnp.sqrt(jnp.sum(ref * ref, axis=1, keepdims=True)), 1e-12
    )

    # Exact f32 MXU path.
    Z32 = dines_encoder_forward(X, params, compute_dtype=jnp.float32)
    Z32 = jax.block_until_ready(Z32)
    assert Z32.shape == (N, K, in_dim // K)
    assert jnp.allclose(Z32, ref, atol=1e-5), "f32 kernel mismatch vs reference"

    # Default bf16 MXU path (v5e/v6e/v7x fast path; f32 accumulate + f32 norm).
    Zbf = dines_encoder_forward(X, params)
    Zbf = jax.block_until_ready(Zbf)
    assert Zbf.shape == (N, K, in_dim // K)
    assert jnp.allclose(Zbf, ref, atol=5e-2), "bf16 kernel mismatch vs reference"

    print("KERNEL_OK")
</pallas_src>

<mosaic_0001>
module attributes {stable_mosaic.version = 11 : i64} {
  func.func @_init_disen_fused_kernel(%arg0: i32, %arg1: memref<16x32xf32, #tpu.memory_space<vmem>>, %arg2: memref<32x128xf32, #tpu.memory_space<vmem>>, %arg3: memref<1x128xf32, #tpu.memory_space<vmem>>, %arg4: memref<16x128xf32, #tpu.memory_space<vmem>>) attributes {dimension_semantics = [#tpu.dimension_semantics<parallel>], iteration_bounds = array<i64: 1>, scalar_prefetch = 0 : i64, scratch_operands = 0 : i64, tpu.core_type = #tpu.core_type<tc>, window_params = [{transform_indices = @transform_0, window_bounds = array<i64: 16, 32>}, {pipeline_mode = #tpu.pipeline_mode<synchronous>, transform_indices = @transform_1, window_bounds = array<i64: 32, 128>}, {pipeline_mode = #tpu.pipeline_mode<synchronous>, transform_indices = @transform_2, window_bounds = array<i64: 1, 128>}, {transform_indices = @transform_3, window_bounds = array<i64: 16, 128>}]} {
    %c0 = arith.constant 0 : index
    %c0_0 = arith.constant 0 : index
    %0 = vector.load %arg1[%c0, %c0_0] : memref<16x32xf32, #tpu.memory_space<vmem>>, vector<16x32xf32>
    %c0_1 = arith.constant 0 : index
    %c0_2 = arith.constant 0 : index
    %1 = vector.load %arg2[%c0_1, %c0_2] : memref<32x128xf32, #tpu.memory_space<vmem>>, vector<32x128xf32>
    %cst = arith.constant dense<0.000000e+00> : vector<16x128xf32>
    %2 = tpu.matmul %0, %1, %cst {dimension_numbers = #tpu.dot_dimension_numbers<[1], [0], [0], [1], [0, 0, 1, 1], [], []>} : vector<16x32xf32>, vector<32x128xf32>, vector<16x128xf32> -> vector<16x128xf32>
    %c0_3 = arith.constant 0 : index
    %c0_4 = arith.constant 0 : index
    %3 = vector.load %arg3[%c0_3, %c0_4] : memref<1x128xf32, #tpu.memory_space<vmem>>, vector<1x128xf32>
    %4 = vector.broadcast %3 : vector<1x128xf32> to vector<16x128xf32>
    %5 = arith.addf %2, %4 : vector<16x128xf32>
    %6 = math.tanh %5 : vector<16x128xf32>
    %7 = vector.extract_strided_slice %6 {offsets = [0, 0], sizes = [16, 32], strides = [1, 1]} : vector<16x128xf32> to vector<16x32xf32>
    %8 = vector.extract_strided_slice %6 {offsets = [0, 32], sizes = [16, 32], strides = [1, 1]} : vector<16x128xf32> to vector<16x32xf32>
    %9 = vector.extract_strided_slice %6 {offsets = [0, 64], sizes = [16, 32], strides = [1, 1]} : vector<16x128xf32> to vector<16x32xf32>
    %10 = vector.extract_strided_slice %6 {offsets = [0, 96], sizes = [16, 32], strides = [1, 1]} : vector<16x128xf32> to vector<16x32xf32>
    %11 = arith.mulf %7, %7 : vector<16x32xf32>
    %12 = arith.mulf %8, %8 : vector<16x32xf32>
    %13 = arith.addf %11, %12 : vector<16x32xf32>
    %14 = arith.mulf %9, %9 : vector<16x32xf32>
    %15 = arith.addf %13, %14 : vector<16x32xf32>
    %16 = arith.mulf %10, %10 : vector<16x32xf32>
    %17 = arith.addf %15, %16 : vector<16x32xf32>
    %cst_5 = arith.constant 1.000000e-24 : f32
    %18 = vector.broadcast %cst_5 : f32 to vector<16x32xf32>
    %19 = arith.maximumf %17, %18 : vector<16x32xf32>
    %20 = math.rsqrt %19 : vector<16x32xf32>
    %21 = arith.mulf %7, %20 : vector<16x32xf32>
    %c0_6 = arith.constant 0 : index
    %c0_7 = arith.constant 0 : index
    %22 = vector.load %arg4[%c0_6, %c0_7] : memref<16x128xf32, #tpu.memory_space<vmem>>, vector<16x32xf32>
    tpu.vector_store %arg4[%c0_6, %c0_7], %21 {strides = array<i32>} : memref<16x128xf32, #tpu.memory_space<vmem>>, vector<16x32xf32>,
    %23 = arith.mulf %8, %20 : vector<16x32xf32>
    %c0_8 = arith.constant 0 : index
    %c32 = arith.constant 32 : index
    %24 = vector.load %arg4[%c0_8, %c32] : memref<16x128xf32, #tpu.memory_space<vmem>>, vector<16x32xf32>
    tpu.vector_store %arg4[%c0_8, %c32], %23 {strides = array<i32>} : memref<16x128xf32, #tpu.memory_space<vmem>>, vector<16x32xf32>,
    %25 = arith.mulf %9, %20 : vector<16x32xf32>
    %c0_9 = arith.constant 0 : index
    %c64 = arith.constant 64 : index
    %26 = vector.load %arg4[%c0_9, %c64] : memref<16x128xf32, #tpu.memory_space<vmem>>, vector<16x32xf32>
    tpu.vector_store %arg4[%c0_9, %c64], %25 {strides = array<i32>} : memref<16x128xf32, #tpu.memory_space<vmem>>, vector<16x32xf32>,
    %27 = arith.mulf %10, %20 : vector<16x32xf32>
    %c0_10 = arith.constant 0 : index
    %c96 = arith.constant 96 : index
    %28 = vector.load %arg4[%c0_10, %c96] : memref<16x128xf32, #tpu.memory_space<vmem>>, vector<16x32xf32>
    tpu.vector_store %arg4[%c0_10, %c96], %27 {strides = array<i32>} : memref<16x128xf32, #tpu.memory_space<vmem>>, vector<16x32xf32>,
    return
  }
  func.func @transform_0(%arg0: i32) -> (i32, i32) {
    %c0_i32 = arith.constant 0 : i32
    %c0_i32_0 = arith.constant 0 : i32
    return %arg0, %c0_i32 : i32, i32
  }
  func.func @transform_1(%arg0: i32) -> (i32, i32) {
    %c0_i32 = arith.constant 0 : i32
    %c0_i32_0 = arith.constant 0 : i32
    %c0_i32_1 = arith.constant 0 : i32
    return %c0_i32, %c0_i32_0 : i32, i32
  }
  func.func @transform_2(%arg0: i32) -> (i32, i32) {
    %c0_i32 = arith.constant 0 : i32
    %c0_i32_0 = arith.constant 0 : i32
    %c0_i32_1 = arith.constant 0 : i32
    return %c0_i32, %c0_i32_0 : i32, i32
  }
  func.func @transform_3(%arg0: i32) -> (i32, i32) {
    %c0_i32 = arith.constant 0 : i32
    %c0_i32_0 = arith.constant 0 : i32
    return %arg0, %c0_i32 : i32, i32
  }
}

</mosaic_0001>

<llo_original>
// kernel: tpu_custom_call.1
$region0: #{tpu_custom_call.1}
  #allocation0 [shape = 'u32[]', space=smem, size = 0x4, offset = 0x4, fixed_abs, tag = 'smem constant byte address 0x4 - core index']
  #allocation1 [shape = 'u32[72,128]{1,0:T(1,128)}', space=vmem, size = 0x9000, scoped, tag = 'internal scratch']
  %s0 = inlined_call_operand.hbm [shape: f32[16,32], index: 0, kind: input, shape index: {}]
  %s1 = inlined_call_operand.hbm [shape: f32[32,128], index: 1, kind: input, shape index: {}]
  %s2 = inlined_call_operand.vmem [shape: f32[1,128], index: 2, kind: input, shape index: {}]
  %s3 = inlined_call_operand.hbm [shape: f32[16,128], index: 3, kind: output, shape index: {}]
  %s4 = sld [smem:[#allocation0]]
  $region30: #{tpu_custom_call.1} parent=0
    _
  %s6 = ssub.s32 1, %s4
  %s7 = scalar_select 0, %s6, %s4
  $region1: #{tpu_custom_call.1} parent=0
    #allocation2 [shape = 'u8[8192]{0}', space=vmem, size = 0x2000, scoped, tag = 'input window, operand 0, single buffered']
    #allocation3 [shape = 's32[1]{0}', space=sflag, size = 0x4, scoped, tag = 'scoped memory for tpu_custom_call.1']
    #allocation4 [shape = 's32[1]{0}', space=sflag, size = 0x4, scoped, tag = 'scoped memory for tpu_custom_call.1']
    #allocation5 [shape = 'u8[16384]{0}', space=vmem, size = 0x4000, scoped, tag = 'input window, operand 1, single buffered']
    #allocation6 [shape = 's32[1]{0}', space=sflag, size = 0x4, scoped, tag = 'scoped memory for tpu_custom_call.1']
    #allocation7 [shape = 'u8[8192]{0}', space=vmem, size = 0x2000, scoped, tag = 'output window, operand 0, single buffered']
    %8 = vsyncpa [#allocation3], 0
    %9 = vsyncpa [#allocation6], 0
    %10 = vsyncpa [#allocation4], 0
    // Predicated region
    $region2: #{tpu_custom_call.1} parent=1 // pred_check
      _
    $region3: #{tpu_custom_call.1} parent=1 // pred_check_branch
      %12 = sbr.rel (0) target = $region5
    $region4: #{tpu_custom_call.1} parent=1 // pred_region
      %14 = vsyncadd [#allocation3], 0
      %s15 = sshll.u32 %s0, 4
      %s16 = int_to_ptr.hbm [resolvable:$true] %s15
      %s17 = sshll.u32 [#allocation2], 4
      %s18 = int_to_ptr.vmem [resolvable:$true] %s17
      %23 = dma.hbm_to_vmem [thread:$0]  %s16, 256, %s18, [#allocation3], 128, 128, 8
    $region5: #{tpu_custom_call.1} parent=1 // pred_fallthru
      _
    // Predicated region
    $region6: #{tpu_custom_call.1} parent=1 // pred_check
      _
    $region7: #{tpu_custom_call.1} parent=1 // pred_check_branch
      %25 = sbr.rel (0) target = $region9
    $region8: #{tpu_custom_call.1} parent=1 // pred_region
      %27 = vsyncadd [#allocation6], 0
      %s28 = sshll.u32 %s1, 4
      %s29 = int_to_ptr.hbm [resolvable:$true] %s28
      %s30 = sshll.u32 [#allocation5], 4
      %s31 = int_to_ptr.vmem [resolvable:$true] %s30
      %36 = dma.hbm_to_vmem [thread:$0]  %s29, 512, %s31, [#allocation6], 128, 128, 8
    $region9: #{tpu_custom_call.1} parent=1 // pred_fallthru
      _
    // Predicated region
    $region10: #{tpu_custom_call.1} parent=1 // pred_check
      _
    $region11: #{tpu_custom_call.1} parent=1 // pred_check_branch
      %38 = sbr.rel (0) target = $region13
    $region12: #{tpu_custom_call.1} parent=1 // pred_region
      _
    $region13: #{tpu_custom_call.1} parent=1 // pred_fallthru
      _
    // Predicated region
    $region14: #{tpu_custom_call.1} parent=1 // pred_check
      _
    $region15: #{tpu_custom_call.1} parent=1 // pred_check_branch
      %40 = sbr.rel (0) target = $region17
    $region16: #{tpu_custom_call.1} parent=1 // pred_region
      %42 = dma.done [#allocation3], 256
    $region17: #{tpu_custom_call.1} parent=1 // pred_fallthru
      _
    // Predicated region
    $region18: #{tpu_custom_call.1} parent=1 // pred_check
      _
    $region19: #{tpu_custom_call.1} parent=1 // pred_check_branch
      %44 = sbr.rel (0) target = $region21
    $region20: #{tpu_custom_call.1} parent=1 // pred_region
      %46 = dma.done [#allocation6], 512
    $region21: #{tpu_custom_call.1} parent=1 // pred_fallthru
      _
    %v47 = vld [vmem:[#allocation2] sm:$0xff]
    %v48 = vld [vmem:[#allocation2 + $0x8] sm:$0xff]
    %v49 = vld [vmem:[#allocation5] sm:$0xff]
    %v50 = vld [vmem:[#allocation5 + $0x8] sm:$0xff]
    %v51 = vld [vmem:[#allocation5 + $0x10] sm:$0xff]
    %v52 = vld [vmem:[#allocation5 + $0x18] sm:$0xff]
    %v53 = vld [vmem:[%s2] sm:$0x1]
    %v55 = vperm.slane %v53, 0
    %vm57 = vcmask 261120
    %v59 = vsel %vm57, %v47, 0
    %v62 = vsel %vm57, %v48, 0
    %64 = vmatpush.msra.mxu0 0.0
    %65 = vmatpush.msra.mxu0 0.0
    %66 = vmatpush.msra.mxu0 0.0
    %67 = vmatpush.msra.mxu0 0.0
    %68 = vmatpush.msra.mxu0 0.0
    %69 = vmatpush.msra.mxu0 0.0
    %70 = vmatpush.msra.mxu0 0.0
    %71 = vmatpush.msra.mxu0 0.0
    %72 = vmatpush.msra.mxu0 0.0
    %73 = vmatpush.msra.mxu0 0.0
    %74 = vmatpush.msra.mxu0 0.0
    %75 = vmatpush.msra.mxu0 0.0
    %76 = vmatpush.msra.mxu0 %v52
    %77 = vmatpush.msra.mxu0 %v51
    %78 = vmatpush.msra.mxu0 %v50
    %79 = vmatpush.msra.mxu0 %v49
    %80 = vmatmul.f32.gmra.mxu0 %v59
    %v81 = vpop.f32.mrf.mxu0
    %v82 = vadd.f32 %v55, %v81
    %83 = vmatmul.f32.gmra.mxu0 %v62
    %v84 = vpop.f32.mrf.mxu0
    %v85 = vadd.f32 %v55, %v84
    %86 = vdwg.mxu0
    %v87 = vtanh.pop %v82
    %v88 = vtanh.pop %v85
    %v89 = vmul.f32 %v87, %v87
    %v90 = vmul.f32 %v88, %v88
    %93 = vrot.lane.b32.xlu0 %v89, 96
    %v94 = vpop.permute.xlu0 %93
    %95 = vrot.lane.b32.xlu0 %v90, 96
    %v96 = vpop.permute.xlu0 %95
    %v99 = vadd.f32 %v89, %v94
    %v100 = vadd.f32 %v90, %v96
    %101 = vrot.lane.b32.xlu0 %v89, 64
    %v102 = vpop.permute.xlu0 %101
    %103 = vrot.lane.b32.xlu0 %v90, 64
    %v104 = vpop.permute.xlu0 %103
    %v107 = vadd.f32 %v99, %v102
    %v108 = vadd.f32 %v100, %v104
    %109 = vrot.lane.b32.xlu0 %v89, 32
    %v110 = vpop.permute.xlu0 %109
    %111 = vrot.lane.b32.xlu0 %v90, 32
    %v112 = vpop.permute.xlu0 %111
    %v115 = vadd.f32 %v107, %v110
    %v116 = vadd.f32 %v108, %v112
    %v117 = vmax.f32 %v115, 1e-24
    %v118 = vmax.f32 %v116, 1e-24
    %v119 = vrsqrt.pop %v117
    %v120 = vmul.f32 %v119, %v117
    %v121 = vmul.f32 %v120, %v119
    %v122 = vmul.f32 0.5, %v121
    %v123 = vsub.f32 1.5, %v122
    %v124 = vmul.f32 %v119, %v123
    %vm125 = vweird.f32 %v117
    %vm126 = vweird.f32 %v119
    %vm127 = vmor %vm125, %vm126
    %v128 = vsel %vm127, %v119, %v124
    %v129 = vrsqrt.pop %v118
    %v130 = vmul.f32 %v129, %v118
    %v131 = vmul.f32 %v130, %v129
    %v132 = vmul.f32 0.5, %v131
    %v133 = vsub.f32 1.5, %v132
    %v134 = vmul.f32 %v129, %v133
    %vm135 = vweird.f32 %v118
    %vm136 = vweird.f32 %v129
    %vm137 = vmor %vm135, %vm136
    %v138 = vsel %vm137, %v129, %v134
    %v139 = vmul.f32 %v87, %v128
    %v140 = vmul.f32 %v88, %v138
    %141 = vst.msk [vmem:[#allocation7] sm:$0xff] %vm57, %v139
    %142 = vst.msk [vmem:[#allocation7 + $0x8] sm:$0xff] %vm57, %v140
    %145 = vrot.lane.b32.xlu0 %v128, 32
    %v146 = vpop.permute.xlu0 %145
    %147 = vrot.lane.b32.xlu0 %v138, 32
    %v148 = vpop.permute.xlu0 %147
    %v151 = vmul.f32 %v87, %v146
    %v152 = vmul.f32 %v88, %v148
    %vm153 = vcmask 523520
    %154 = vst.msk [vmem:[#allocation7] sm:$0xff] %vm153, %v151
    %155 = vst.msk [vmem:[#allocation7 + $0x8] sm:$0xff] %vm153, %v152
    %156 = vrot.lane.b32.xlu0 %v128, 64
    %v157 = vpop.permute.xlu0 %156
    %158 = vrot.lane.b32.xlu0 %v138, 64
    %v159 = vpop.permute.xlu0 %158
    %v162 = vmul.f32 %v87, %v157
    %v163 = vmul.f32 %v88, %v159
    %vm164 = vcmask 785920
    %165 = vst.msk [vmem:[#allocation7] sm:$0xff] %vm164, %v162
    %166 = vst.msk [vmem:[#allocation7 + $0x8] sm:$0xff] %vm164, %v163
    %167 = vrot.lane.b32.xlu0 %v128, 96
    %v168 = vpop.permute.xlu0 %167
    %169 = vrot.lane.b32.xlu0 %v138, 96
    %v170 = vpop.permute.xlu0 %169
    %v173 = vmul.f32 %v87, %v168
    %v174 = vmul.f32 %v88, %v170
    %vm175 = vcmask 1048320
    %176 = vst.msk [vmem:[#allocation7] sm:$0xff] %vm175, %v173
    %177 = vst.msk [vmem:[#allocation7 + $0x8] sm:$0xff] %vm175, %v174
    // Predicated region
    $region22: #{tpu_custom_call.1} parent=1 // pred_check
      _
    $region23: #{tpu_custom_call.1} parent=1 // pred_check_branch
      %179 = sbr.rel (0) target = $region25
    $region24: #{tpu_custom_call.1} parent=1 // pred_region
      %181 = vsyncadd [#allocation4], 0
      %s182 = sshll.u32 [#allocation7], 4
      %s183 = int_to_ptr.vmem [resolvable:$true] %s182
      %s184 = sshll.u32 %s3, 4
      %s185 = int_to_ptr.hbm [resolvable:$true] %s184
      %190 = dma.vmem_to_hbm [thread:$0]  %s183, 256, %s185, [#allocation4], 128, 128, 8
    $region25: #{tpu_custom_call.1} parent=1 // pred_fallthru
      _
    // Predicated region
    $region26: #{tpu_custom_call.1} parent=1 // pred_check
      _
    $region27: #{tpu_custom_call.1} parent=1 // pred_check_branch
      %192 = sbr.rel (0) target = $region29
    $region28: #{tpu_custom_call.1} parent=1 // pred_region
      %194 = dma.done [#allocation4], 256
    $region29: #{tpu_custom_call.1} parent=1 // pred_fallthru
      _
    %195 = vsyncpa [#allocation3], 1
    %196 = vsyncpa [#allocation6], 1
    %197 = vsyncpa [#allocation4], 1

</llo_original>
